<compile_context>
chip_gen: v7x
topology: tpu7x:2x2x1
jax: 0.10.0
libtpu: 0.0.40
codegen_flags: <defaults>
</compile_context>

<pallas_src>
import numpy as np

import jax
import jax.numpy as jnp
from jax.experimental import pallas as pl
from jax.experimental.pallas import tpu as pltpu


def _yolo_kernel(msig_ref, mexp_ref, mid_ref, addg_ref, p_ref, o_ref):
    # msig/mexp/mid: (nA, HEAD, 1) f32, addg: (1, HEAD, nG2) f32
    # p_ref / o_ref: (1, nA, A, nG2) block for one batch element.
    A = p_ref.shape[2]
    HEAD = msig_ref.shape[1]

    p_head = p_ref[0, :, 0:HEAD, :].astype(jnp.float32)      # (nA, HEAD, nG2)

    sig = jax.nn.sigmoid(p_head)       # used for rows 0,1,4 (others zeroed by msig)
    expd = jnp.exp(p_head)             # used for rows 2,3

    msig = msig_ref[...]
    mexp = mexp_ref[...]
    mid = mid_ref[...]
    addg = addg_ref[...]

    # Guard the exp term with a select (not *0) so an overflowed exp() on a
    # pass-through row can never leak a NaN into the output.
    mexp_b = jnp.broadcast_to(mexp, expd.shape)
    wh = jnp.where(mexp_b != 0.0, expd * mexp_b, 0.0)

    out_head = sig * msig + wh + p_head * mid + addg
    o_ref[0, :, 0:HEAD, :] = out_head.astype(o_ref.dtype)

    if A > HEAD:  # remaining class-logit rows: pure pass-through copy
        o_ref[0, :, HEAD:A, :] = p_ref[0, :, HEAD:A, :]


def yolo_layer_forward(p, anchors, nC, img_dim, anchor_idxs, cfg="yolov3.cfg",
                       keep_lane_dense_layout=False):
    """Inference-mode YOLOLayer.forward (targets=None, ONNX_EXPORT=False)."""
    bs, ch, nG, nG_w = p.shape
    assert nG == nG_w
    nA = len(anchors)
    A = 5 + nC
    assert ch == nA * A

    # stride logic copied from __init__
    if anchor_idxs[0] == nA * 2:
        stride = 32
    elif anchor_idxs[0] == nA:
        stride = 16
    else:
        stride = 8
    if cfg.endswith("yolov3-tiny.cfg"):
        stride *= 2
    assert int(img_dim / stride) == nG

    nG2 = nG * nG
    HEAD = min(8, A)  # rows handled by the transcendental/coefficient path

    # (bs, nA*(5+nC), nG, nG) -> (bs, nA, A, nG*nG); dtype preserved (upcast in-kernel).
    p_r = p.reshape(bs, nA, A, nG2)

    # Per-(anchor, attribute) coefficients, built host-side (static).
    anc = np.asarray(anchors, dtype=np.float32)              # raw pixel anchors
    msig = np.zeros((nA, HEAD, 1), np.float32)
    mexp = np.zeros((nA, HEAD, 1), np.float32)
    mid = np.zeros((nA, HEAD, 1), np.float32)
    msig[:, 0, 0] = stride                                    # x: (sigmoid + gx) * stride
    msig[:, 1, 0] = stride                                    # y: (sigmoid + gy) * stride
    mexp[:, 2, 0] = anc[:, 0]                                 # w: exp * (aw/stride) * stride
    mexp[:, 3, 0] = anc[:, 1]                                 # h: exp * (ah/stride) * stride
    msig[:, 4, 0] = 1.0                                       # conf: sigmoid
    mid[:, 5:HEAD, 0] = 1.0                                   # class logits: identity

    # Flattened grid offsets pre-multiplied by stride (rows 0/1, zeros elsewhere).
    addg = np.zeros((1, HEAD, nG2), np.float32)
    addg[0, 0, :] = np.tile(np.arange(nG, dtype=np.float32), nG) * stride    # grid_x
    addg[0, 1, :] = np.repeat(np.arange(nG, dtype=np.float32), nG) * stride  # grid_y

    out = pl.pallas_call(
        _yolo_kernel,
        out_shape=jax.ShapeDtypeStruct((bs, nA, A, nG2), p.dtype),
        grid=(bs,),
        in_specs=[
            pl.BlockSpec((nA, HEAD, 1), lambda b: (0, 0, 0)),      # msig
            pl.BlockSpec((nA, HEAD, 1), lambda b: (0, 0, 0)),      # mexp
            pl.BlockSpec((nA, HEAD, 1), lambda b: (0, 0, 0)),      # mid
            pl.BlockSpec((1, HEAD, nG2), lambda b: (0, 0, 0)),     # addg
            pl.BlockSpec((1, nA, A, nG2), lambda b: (b, 0, 0, 0)),  # p
        ],
        out_specs=pl.BlockSpec((1, nA, A, nG2), lambda b: (b, 0, 0, 0)),
        input_output_aliases={4: 0},   # p block is fully overwritten -> donate buffer
        compiler_params=pltpu.CompilerParams(
            dimension_semantics=("parallel",)),
    )(jnp.asarray(msig), jnp.asarray(mexp), jnp.asarray(mid), jnp.asarray(addg), p_r)

    if keep_lane_dense_layout:
        return out                                    # (bs, nA, A, nG*nG), lane-dense

    # PyTorch layout glue (outside the kernel; 9-wide minor dim is lane-sparse):
    # (bs, nA, A, nG2) -> (bs, nA, nG, nG, A) -> (bs, nA*nG*nG, A)
    out = out.reshape(bs, nA, A, nG, nG).transpose(0, 1, 3, 4, 2)
    return out.reshape(bs, nA * nG * nG, A)


def yolo_layer_ref(p, anchors, nC, stride):
    """Pure-JAX reference mirroring the PyTorch inference branch."""
    bs, ch, nG, _ = p.shape
    nA = len(anchors)
    A = 5 + nC
    pr = p.astype(jnp.float32).reshape(bs, nA, A, nG, nG).transpose(0, 1, 3, 4, 2)
    gx = jnp.arange(nG, dtype=jnp.float32)[None, None, None, :]
    gy = jnp.arange(nG, dtype=jnp.float32)[None, None, :, None]
    anchor_wh = jnp.asarray(anchors, jnp.float32) / stride
    aw = anchor_wh[:, 0][None, :, None, None]
    ah = anchor_wh[:, 1][None, :, None, None]
    x = (jax.nn.sigmoid(pr[..., 0]) + gx) * stride
    y = (jax.nn.sigmoid(pr[..., 1]) + gy) * stride
    w = jnp.exp(pr[..., 2]) * aw * stride
    h = jnp.exp(pr[..., 3]) * ah * stride
    conf = jax.nn.sigmoid(pr[..., 4])
    cls = pr[..., 5:]
    out = jnp.concatenate(
        [x[..., None], y[..., None], w[..., None], h[..., None], conf[..., None], cls],
        axis=-1)
    return out.reshape(bs, -1, A)


# TODO(synk): training branch (build_targets + MSE/BCE/CE losses) and the
# ONNX_EXPORT branch are not implemented; only the inference forward is ported.

if __name__ == "__main__":
    # Module configuration: nA=3 anchors, anchor_idxs=(0,1,2) -> stride=8,
    # img_dim=128 -> nG=16, nC=4 -> bbox_attrs=9, channels = 3*9 = 27.
    anchors = [(10.0, 13.0), (16.0, 30.0), (33.0, 23.0)]
    nC = 4
    img_dim = 128
    anchor_idxs = (0, 1, 2)

    bs, nA, A, nG = 2, len(anchors), 5 + nC, 16
    key = jax.random.PRNGKey(0)
    p_in = jax.random.normal(key, (bs, nA * A, nG, nG), dtype=jnp.float32) * 0.5

    out = yolo_layer_forward(p_in, anchors, nC, img_dim, anchor_idxs)
    out = jax.block_until_ready(out)

    ref = yolo_layer_ref(p_in, anchors, nC, stride=8)
    assert out.shape == (bs, nA * nG * nG, A), out.shape
    assert jnp.allclose(out, ref, atol=1e-5, rtol=1e-5), "mismatch vs reference"

    print("KERNEL_OK")
</pallas_src>

<mosaic_0001>
module attributes {stable_mosaic.version = 11 : i64} {
  func.func @_yolo_kernel(%arg0: i32, %arg1: memref<3x8x1xf32, #tpu.memory_space<vmem>>, %arg2: memref<3x8x1xf32, #tpu.memory_space<vmem>>, %arg3: memref<3x8x1xf32, #tpu.memory_space<vmem>>, %arg4: memref<1x8x256xf32, #tpu.memory_space<vmem>>, %arg5: memref<1x3x9x256xf32, #tpu.memory_space<vmem>>, %arg6: memref<1x3x9x256xf32, #tpu.memory_space<vmem>>) attributes {dimension_semantics = [#tpu.dimension_semantics<parallel>], iteration_bounds = array<i64: 2>, scalar_prefetch = 0 : i64, scratch_operands = 0 : i64, tpu.core_type = #tpu.core_type<tc>, window_params = [{pipeline_mode = #tpu.pipeline_mode<synchronous>, transform_indices = @transform_0, window_bounds = array<i64: 3, 8, 1>}, {pipeline_mode = #tpu.pipeline_mode<synchronous>, transform_indices = @transform_1, window_bounds = array<i64: 3, 8, 1>}, {pipeline_mode = #tpu.pipeline_mode<synchronous>, transform_indices = @transform_2, window_bounds = array<i64: 3, 8, 1>}, {pipeline_mode = #tpu.pipeline_mode<synchronous>, transform_indices = @transform_3, window_bounds = array<i64: 1, 8, 256>}, {transform_indices = @transform_4, window_bounds = array<i64: 1, 3, 9, 256>}, {transform_indices = @transform_5, window_bounds = array<i64: 1, 3, 9, 256>}]} {
    %c0 = arith.constant 0 : index
    %c0_0 = arith.constant 0 : index
    %c0_1 = arith.constant 0 : index
    %c0_2 = arith.constant 0 : index
    %0 = vector.load %arg5[%c0, %c0_0, %c0_1, %c0_2] : memref<1x3x9x256xf32, #tpu.memory_space<vmem>>, vector<1x3x8x256xf32>
    %1 = vector.shape_cast %0 : vector<1x3x8x256xf32> to vector<3x8x256xf32>
    %2 = arith.negf %1 : vector<3x8x256xf32>
    %3 = math.exp %2 : vector<3x8x256xf32>
    %cst = arith.constant 1.000000e+00 : f32
    %4 = vector.broadcast %cst : f32 to vector<3x8x256xf32>
    %5 = arith.addf %4, %3 : vector<3x8x256xf32>
    %6 = arith.divf %4, %5 : vector<3x8x256xf32>
    %7 = math.exp %1 : vector<3x8x256xf32>
    %c0_3 = arith.constant 0 : index
    %c0_4 = arith.constant 0 : index
    %c0_5 = arith.constant 0 : index
    %8 = vector.load %arg1[%c0_3, %c0_4, %c0_5] : memref<3x8x1xf32, #tpu.memory_space<vmem>>, vector<3x8x1xf32>
    %c0_6 = arith.constant 0 : index
    %c0_7 = arith.constant 0 : index
    %c0_8 = arith.constant 0 : index
    %9 = vector.load %arg2[%c0_6, %c0_7, %c0_8] : memref<3x8x1xf32, #tpu.memory_space<vmem>>, vector<3x8x1xf32>
    %c0_9 = arith.constant 0 : index
    %c0_10 = arith.constant 0 : index
    %c0_11 = arith.constant 0 : index
    %10 = vector.load %arg3[%c0_9, %c0_10, %c0_11] : memref<3x8x1xf32, #tpu.memory_space<vmem>>, vector<3x8x1xf32>
    %c0_12 = arith.constant 0 : index
    %c0_13 = arith.constant 0 : index
    %c0_14 = arith.constant 0 : index
    %11 = vector.load %arg4[%c0_12, %c0_13, %c0_14] : memref<1x8x256xf32, #tpu.memory_space<vmem>>, vector<1x8x256xf32>
    %12 = vector.shape_cast %9 : vector<3x8x1xf32> to vector<3x8x1xf32>
    %13 = vector.broadcast %12 : vector<3x8x1xf32> to vector<3x8x256xf32>
    %cst_15 = arith.constant 0.000000e+00 : f32
    %14 = vector.broadcast %cst_15 : f32 to vector<3x8x256xf32>
    %15 = arith.cmpf one, %13, %14 : vector<3x8x256xf32>
    %16 = arith.mulf %7, %13 : vector<3x8x256xf32>
    %cst_16 = arith.constant 0.000000e+00 : f32
    %17 = vector.broadcast %cst_16 : f32 to vector<3x8x256xf32>
    %18 = arith.select %15, %16, %17 : vector<3x8x256xi1>, vector<3x8x256xf32>
    %19 = vector.broadcast %8 : vector<3x8x1xf32> to vector<3x8x256xf32>
    %20 = arith.mulf %6, %19 : vector<3x8x256xf32>
    %21 = arith.addf %20, %18 : vector<3x8x256xf32>
    %22 = vector.broadcast %10 : vector<3x8x1xf32> to vector<3x8x256xf32>
    %23 = arith.mulf %1, %22 : vector<3x8x256xf32>
    %24 = arith.addf %21, %23 : vector<3x8x256xf32>
    %25 = vector.broadcast %11 : vector<1x8x256xf32> to vector<3x8x256xf32>
    %26 = arith.addf %24, %25 : vector<3x8x256xf32>
    %c0_17 = arith.constant 0 : index
    %c0_18 = arith.constant 0 : index
    %c0_19 = arith.constant 0 : index
    %c0_20 = arith.constant 0 : index
    %27 = vector.load %arg6[%c0_17, %c0_18, %c0_19, %c0_20] : memref<1x3x9x256xf32, #tpu.memory_space<vmem>>, vector<1x3x8x256xf32>
    %28 = vector.shape_cast %27 : vector<1x3x8x256xf32> to vector<3x8x256xf32>
    %29 = vector.shape_cast %26 : vector<3x8x256xf32> to vector<1x3x8x256xf32>
    tpu.vector_store %arg6[%c0_17, %c0_18, %c0_19, %c0_20], %29 {strides = array<i32>} : memref<1x3x9x256xf32, #tpu.memory_space<vmem>>, vector<1x3x8x256xf32>,
    %c0_21 = arith.constant 0 : index
    %c0_22 = arith.constant 0 : index
    %c8 = arith.constant 8 : index
    %c0_23 = arith.constant 0 : index
    %30 = vector.load %arg5[%c0_21, %c0_22, %c8, %c0_23] : memref<1x3x9x256xf32, #tpu.memory_space<vmem>>, vector<1x3x1x256xf32>
    %31 = vector.shape_cast %30 : vector<1x3x1x256xf32> to vector<3x1x256xf32>
    %c0_24 = arith.constant 0 : index
    %c0_25 = arith.constant 0 : index
    %c8_26 = arith.constant 8 : index
    %c0_27 = arith.constant 0 : index
    %32 = vector.load %arg6[%c0_24, %c0_25, %c8_26, %c0_27] : memref<1x3x9x256xf32, #tpu.memory_space<vmem>>, vector<1x3x1x256xf32>
    %33 = vector.shape_cast %32 : vector<1x3x1x256xf32> to vector<3x1x256xf32>
    %34 = vector.shape_cast %31 : vector<3x1x256xf32> to vector<1x3x1x256xf32>
    tpu.vector_store %arg6[%c0_24, %c0_25, %c8_26, %c0_27], %34 {strides = array<i32>} : memref<1x3x9x256xf32, #tpu.memory_space<vmem>>, vector<1x3x1x256xf32>,
    return
  }
  func.func @transform_0(%arg0: i32) -> (i32, i32, i32) {
    %c0_i32 = arith.constant 0 : i32
    %c0_i32_0 = arith.constant 0 : i32
    %c0_i32_1 = arith.constant 0 : i32
    %c0_i32_2 = arith.constant 0 : i32
    return %c0_i32, %c0_i32_0, %c0_i32_1 : i32, i32, i32
  }
  func.func @transform_1(%arg0: i32) -> (i32, i32, i32) {
    %c0_i32 = arith.constant 0 : i32
    %c0_i32_0 = arith.constant 0 : i32
    %c0_i32_1 = arith.constant 0 : i32
    %c0_i32_2 = arith.constant 0 : i32
    return %c0_i32, %c0_i32_0, %c0_i32_1 : i32, i32, i32
  }
  func.func @transform_2(%arg0: i32) -> (i32, i32, i32) {
    %c0_i32 = arith.constant 0 : i32
    %c0_i32_0 = arith.constant 0 : i32
    %c0_i32_1 = arith.constant 0 : i32
    %c0_i32_2 = arith.constant 0 : i32
    return %c0_i32, %c0_i32_0, %c0_i32_1 : i32, i32, i32
  }
  func.func @transform_3(%arg0: i32) -> (i32, i32, i32) {
    %c0_i32 = arith.constant 0 : i32
    %c0_i32_0 = arith.constant 0 : i32
    %c0_i32_1 = arith.constant 0 : i32
    %c0_i32_2 = arith.constant 0 : i32
    return %c0_i32, %c0_i32_0, %c0_i32_1 : i32, i32, i32
  }
  func.func @transform_4(%arg0: i32) -> (i32, i32, i32, i32) {
    %c0_i32 = arith.constant 0 : i32
    %c0_i32_0 = arith.constant 0 : i32
    %c0_i32_1 = arith.constant 0 : i32
    %c0_i32_2 = arith.constant 0 : i32
    return %arg0, %c0_i32, %c0_i32_0, %c0_i32_1 : i32, i32, i32, i32
  }
  func.func @transform_5(%arg0: i32) -> (i32, i32, i32, i32) {
    %c0_i32 = arith.constant 0 : i32
    %c0_i32_0 = arith.constant 0 : i32
    %c0_i32_1 = arith.constant 0 : i32
    %c0_i32_2 = arith.constant 0 : i32
    return %arg0, %c0_i32, %c0_i32_0, %c0_i32_1 : i32, i32, i32, i32
  }
}

</mosaic_0001>

<llo_original>
// kernel: tpu_custom_call.1
$region0: #{tpu_custom_call.1}
  #allocation0 [shape = 'u32[]', space=smem, size = 0x4, offset = 0x4, fixed_abs, tag = 'smem constant byte address 0x4 - core index']
  #allocation1 [shape = 'u32[144,128]{1,0:T(1,128)}', space=vmem, size = 0x12000, scoped, tag = 'internal scratch']
  %s0 = inlined_call_operand.vmem [shape: f32[3,8,1], index: 0, kind: input, shape index: {}]
  %s1 = inlined_call_operand.vmem [shape: f32[3,8,1], index: 1, kind: input, shape index: {}]
  %s2 = inlined_call_operand.vmem [shape: f32[3,8,1], index: 2, kind: input, shape index: {}]
  %s3 = inlined_call_operand.vmem [shape: f32[1,8,256], index: 3, kind: input, shape index: {}]
  %s4 = inlined_call_operand.vmem [shape: f32[2,3,9,256], index: 4, kind: input, shape index: {}, may-alias: {4,5}]
  %s5 = inlined_call_operand.vmem [shape: f32[2,3,9,256], index: 5, kind: output, shape index: {}, may-alias: {4,5}]
  %s6 = sld [smem:[#allocation0]]
  $region53: #{tpu_custom_call.1} parent=0
    _
  %s8 = ssub.s32 1, %s6
  %s9 = scalar_select 0, %s8, %s6
  loop: start=0, step=1, limit=4
  $region2: #{tpu_custom_call.1} parent=0 // loop_pre_header
    _
  $region3: #{tpu_custom_call.1} parent=0 // loop_header
    %s11 = sphi 0, %s15
    %p12 = scmp.ge.s32.totalorder %s11, 4
    %s19 = sphi 0, %s19
    %s21 = sphi 0, %s19
    %s22 = sphi 0, %s21
    %s36 = sphi 0, %s22
    %s40 = sphi 0, %s40
    %s42 = sphi 0, %s40
    %s43 = sphi 0, %s42
    %s57 = sphi 0, %s43
    %s61 = sphi 0, %s61
    %s63 = sphi 0, %s61
    %s64 = sphi 0, %s63
    %s78 = sphi 0, %s64
    %s82 = sphi 0, %s82
    %s84 = sphi 0, %s82
    %s85 = sphi 0, %s84
    %s99 = sphi 0, %s85
    %s105 = sphi 0, %s107
    %s108 = sphi 0, %s105
    %s109 = sphi 0, %s108
    %s125 = sphi 0, %s109
    %s131 = sphi 0, %s133
    %s134 = sphi 0, %s131
    %s135 = sphi 0, %s134
    %s151 = sphi 0, %s135
  $region4: #{tpu_custom_call.1} parent=0 // loop_header_branch
    %14 = sbr.rel (%p12) target = $region8
  $region5: #{tpu_custom_call.1} parent=0 // loop_body
    %s16 = ssub.s32 %s11, 1
    %s17 = ssub.s32 %s11, 2
    %s18 = sadd.s32 %s11, 1
    %s20 = sadd.s32 %s19, 1
    %p23 = scmp.eq.s32.totalorder %s11, 1
    %p24 = scmp.ne.s32.totalorder %s19, %s21
    %p25 = scmp.eq.s32.totalorder %s11, 0
    %p26 = por %p24, %p25
    %p27 = scmp.ne.s32.totalorder %s19, %s21
    %p28 = scmp.eq.s32.totalorder %s16, 1
    %p29 = por %p27, %p28
    %p30 = scmp.ne.s32.totalorder %s21, %s22
    %p31 = scmp.eq.s32.totalorder %s16, 0
    %p32 = por %p30, %p31
    %p33 = scmp.ne.s32.totalorder %s21, %s22
    %p34 = scmp.eq.s32.totalorder %s17, 1
    %p35 = por %p33, %p34
    %p37 = scmp.ne.s32.totalorder %s22, %s36
    %p38 = scmp.eq.s32.totalorder %s17, 0
    %p39 = por %p37, %p38
    %s41 = sadd.s32 %s40, 1
    %p44 = scmp.eq.s32.totalorder %s11, 1
    %p45 = scmp.ne.s32.totalorder %s40, %s42
    %p46 = scmp.eq.s32.totalorder %s11, 0
    %p47 = por %p45, %p46
    %p48 = scmp.ne.s32.totalorder %s40, %s42
    %p49 = scmp.eq.s32.totalorder %s16, 1
    %p50 = por %p48, %p49
    %p51 = scmp.ne.s32.totalorder %s42, %s43
    %p52 = scmp.eq.s32.totalorder %s16, 0
    %p53 = por %p51, %p52
    %p54 = scmp.ne.s32.totalorder %s42, %s43
    %p55 = scmp.eq.s32.totalorder %s17, 1
    %p56 = por %p54, %p55
    %p58 = scmp.ne.s32.totalorder %s43, %s57
    %p59 = scmp.eq.s32.totalorder %s17, 0
    %p60 = por %p58, %p59
    %s62 = sadd.s32 %s61, 1
    %p65 = scmp.eq.s32.totalorder %s11, 1
    %p66 = scmp.ne.s32.totalorder %s61, %s63
    %p67 = scmp.eq.s32.totalorder %s11, 0
    %p68 = por %p66, %p67
    %p69 = scmp.ne.s32.totalorder %s61, %s63
    %p70 = scmp.eq.s32.totalorder %s16, 1
    %p71 = por %p69, %p70
    %p72 = scmp.ne.s32.totalorder %s63, %s64
    %p73 = scmp.eq.s32.totalorder %s16, 0
    %p74 = por %p72, %p73
    %p75 = scmp.ne.s32.totalorder %s63, %s64
    %p76 = scmp.eq.s32.totalorder %s17, 1
    %p77 = por %p75, %p76
    %p79 = scmp.ne.s32.totalorder %s64, %s78
    %p80 = scmp.eq.s32.totalorder %s17, 0
    %p81 = por %p79, %p80
    %s83 = sadd.s32 %s82, 1
    %p86 = scmp.eq.s32.totalorder %s11, 1
    %p87 = scmp.ne.s32.totalorder %s82, %s84
    %p88 = scmp.eq.s32.totalorder %s11, 0
    %p89 = por %p87, %p88
    %p90 = scmp.ne.s32.totalorder %s82, %s84
    %p91 = scmp.eq.s32.totalorder %s16, 1
    %p92 = por %p90, %p91
    %p93 = scmp.ne.s32.totalorder %s84, %s85
    %p94 = scmp.eq.s32.totalorder %s16, 0
    %p95 = por %p93, %p94
    %p96 = scmp.ne.s32.totalorder %s84, %s85
    %p97 = scmp.eq.s32.totalorder %s17, 1
    %p98 = por %p96, %p97
    %p100 = scmp.ne.s32.totalorder %s85, %s99
    %p101 = scmp.eq.s32.totalorder %s17, 0
    %p102 = por %p100, %p101
    %s103 = ssub.s32 %s11, %s18
    %p104 = scmp.eq.s32.totalorder %s103, 0
    %s106 = sadd.s32 %s105, 1
    %s107 = scalar_select %p104, %s105, %s106
    %p110 = pneg %p104
    %p111 = scmp.eq.s32.totalorder %s11, 1
    %p112 = por %p110, %p111
    %p113 = scmp.ne.s32.totalorder %s105, %s108
    %p114 = scmp.eq.s32.totalorder %s11, 0
    %p115 = por %p113, %p114
    %p116 = scmp.ne.s32.totalorder %s105, %s108
    %p117 = scmp.eq.s32.totalorder %s16, 1
    %p118 = por %p116, %p117
    %p119 = scmp.ne.s32.totalorder %s108, %s109
    %p120 = scmp.eq.s32.totalorder %s16, 0
    %p121 = por %p119, %p120
    %p122 = scmp.ne.s32.totalorder %s108, %s109
    %p123 = scmp.eq.s32.totalorder %s17, 1
    %p124 = por %p122, %p123
    %p126 = scmp.ne.s32.totalorder %s109, %s125
    %p127 = scmp.eq.s32.totalorder %s17, 0
    %p128 = por %p126, %p127
    %s129 = ssub.s32 %s11, %s18
    %p130 = scmp.eq.s32.totalorder %s129, 0
    %s132 = sadd.s32 %s131, 1
    %s133 = scalar_select %p130, %s131, %s132
    %p136 = pneg %p130
    %p137 = scmp.eq.s32.totalorder %s11, 1
    %p138 = por %p136, %p137
    %p139 = scmp.ne.s32.totalorder %s131, %s134
    %p140 = scmp.eq.s32.totalorder %s11, 0
    %p141 = por %p139, %p140
    %p142 = scmp.ne.s32.totalorder %s131, %s134
    %p143 = scmp.eq.s32.totalorder %s16, 1
    %p144 = por %p142, %p143
    %p145 = scmp.ne.s32.totalorder %s134, %s135
    %p146 = scmp.eq.s32.totalorder %s16, 0
    %p147 = por %p145, %p146
    %p148 = scmp.ne.s32.totalorder %s134, %s135
    %p149 = scmp.eq.s32.totalorder %s17, 1
    %p150 = por %p148, %p149
    %p152 = scmp.ne.s32.totalorder %s135, %s151
    %p153 = scmp.eq.s32.totalorder %s17, 0
    %p154 = por %p152, %p153
    %p155 = scmp.le.s32.totalorder 1, %s11
    %p156 = scmp.lt.s32.totalorder %s11, 3
    %p157 = pnand %p155, %p156
    %p158 = pneg %p157
    // Predicated region
    $region9: #{tpu_custom_call.1} parent=5 // pred_check
      _
    $region10: #{tpu_custom_call.1} parent=5 // pred_check_branch
      %160 = sbr.rel (%p157) target = $region12
    $region11: #{tpu_custom_call.1} parent=5 // pred_region
      %s161 = ssub.s32 %s11, 1
      // Predicated region
      $region13: #{tpu_custom_call.1} parent=11 // pred_check
        %p162 = pneg %p32
      $region14: #{tpu_custom_call.1} parent=11 // pred_check_branch
        %164 = sbr.rel (%p162) target = $region16
      $region15: #{tpu_custom_call.1} parent=11 // pred_region
        _
      $region16: #{tpu_custom_call.1} parent=11 // pred_fallthru
        _
      // Predicated region
      $region17: #{tpu_custom_call.1} parent=11 // pred_check
        %p165 = pneg %p53
      $region18: #{tpu_custom_call.1} parent=11 // pred_check_branch
        %167 = sbr.rel (%p165) target = $region20
      $region19: #{tpu_custom_call.1} parent=11 // pred_region
        _
      $region20: #{tpu_custom_call.1} parent=11 // pred_fallthru
        _
      // Predicated region
      $region21: #{tpu_custom_call.1} parent=11 // pred_check
        %p168 = pneg %p74
      $region22: #{tpu_custom_call.1} parent=11 // pred_check_branch
        %170 = sbr.rel (%p168) target = $region24
      $region23: #{tpu_custom_call.1} parent=11 // pred_region
        _
      $region24: #{tpu_custom_call.1} parent=11 // pred_fallthru
        _
      // Predicated region
      $region25: #{tpu_custom_call.1} parent=11 // pred_check
        %p171 = pneg %p95
      $region26: #{tpu_custom_call.1} parent=11 // pred_check_branch
        %173 = sbr.rel (%p171) target = $region28
      $region27: #{tpu_custom_call.1} parent=11 // pred_region
        _
      $region28: #{tpu_custom_call.1} parent=11 // pred_fallthru
        _
    $region12: #{tpu_custom_call.1} parent=5 // pred_fallthru
      _
    %p174 = scmp.lt.s32.totalorder %s11, 2
    // Predicated region
    $region29: #{tpu_custom_call.1} parent=5 // pred_check
      %p175 = pneg %p174
    $region30: #{tpu_custom_call.1} parent=5 // pred_check_branch
      %177 = sbr.rel (%p175) target = $region32
    $region31: #{tpu_custom_call.1} parent=5 // pred_region
      // Predicated region
      $region33: #{tpu_custom_call.1} parent=31 // pred_check
        %p178 = pneg %p115
      $region34: #{tpu_custom_call.1} parent=31 // pred_check_branch
        %180 = sbr.rel (%p178) target = $region36
      $region35: #{tpu_custom_call.1} parent=31 // pred_region
        %p181 = scmp.lt.s32.totalorder %s11, 1
        %s182 = scalar_select %p181, %s11, 1
        %s183 = smul.addr %s182, 12
        %s184 = smul.addr %s183, 8
        %s185 = scalar_lea.vmem %s4, %s184
      $region36: #{tpu_custom_call.1} parent=31 // pred_fallthru
        _
    $region32: #{tpu_custom_call.1} parent=5 // pred_fallthru
      _
    %p186 = scmp.le.s32.totalorder 1, %s11
    %p187 = scmp.lt.s32.totalorder %s11, 3
    %p188 = pnand %p186, %p187
    %p189 = pneg %p188
    // Predicated region
    $region37: #{tpu_custom_call.1} parent=5 // pred_check
      _
    $region38: #{tpu_custom_call.1} parent=5 // pred_check_branch
      %191 = sbr.rel (%p188) target = $region40
    $region39: #{tpu_custom_call.1} parent=5 // pred_region
      %s192 = ssub.s32 %s11, 1
      %p193 = pneg %p32
      %p194 = pneg %p29
      %p195 = pneg %p53
      %p196 = pneg %p50
      %p197 = pneg %p74
      %p198 = pneg %p71
      %p199 = pneg %p95
      %p200 = pneg %p92
      %p201 = scmp.lt.s32.totalorder %s16, 1
      %s202 = scalar_select %p201, %s16, 1
      %s203 = smul.addr %s202, 12
      %s204 = smul.addr %s203, 8
      %s205 = scalar_lea.vmem %s4, %s204
      %p206 = pneg %p121
      %p207 = pneg %p118
      %p208 = pneg %p147
      %p209 = pneg %p144
      %p210 = scmp.lt.s32.totalorder %s16, 1
      %s211 = scalar_select %p210, %s16, 1
      %s212 = smul.addr %s211, 12
      %s213 = smul.addr %s212, 8
      %s214 = scalar_lea.vmem %s5, %s213
      %p215 = scmp.lt.s32.totalorder %s16, 1
      %s216 = scalar_select %p215, %s16, 1
      %s217 = smul.addr %s216, 12
      %s218 = smul.addr %s217, 8
      %s219 = scalar_lea.vmem %s4, %s218
      %p220 = scmp.lt.s32.totalorder %s16, 1
      %s221 = scalar_select %p220, %s16, 1
      %s222 = smul.addr %s221, 12
      %s223 = smul.addr %s222, 8
      %s224 = scalar_lea.vmem %s5, %s223
      %v225 = vld [vmem:[%s219] sm:$0xff]
      %v226 = vld [vmem:[%s219 + $0x8] sm:$0xff]
      %v227 = vld [vmem:[%s219 + $0x20] sm:$0xff]
      %v228 = vld [vmem:[%s219 + $0x28] sm:$0xff]
      %v229 = vld [vmem:[%s219 + $0x40] sm:$0xff]
      %v230 = vld [vmem:[%s219 + $0x48] sm:$0xff]
      %v231 = vxor.u32 %v225, 2147483648
      %v232 = vxor.u32 %v226, 2147483648
      %v233 = vxor.u32 %v227, 2147483648
      %v234 = vxor.u32 %v228, 2147483648
      %v235 = vxor.u32 %v229, 2147483648
      %v236 = vxor.u32 %v230, 2147483648
      %v237 = vmul.f32 %v231, 1.442695
      %v238 = vpow.pop %v237
      %v239 = vmul.f32 %v232, 1.442695
      %v240 = vpow.pop %v239
      %v241 = vmul.f32 %v233, 1.442695
      %v242 = vpow.pop %v241
      %v243 = vmul.f32 %v234, 1.442695
      %v244 = vpow.pop %v243
      %v245 = vmul.f32 %v235, 1.442695
      %v246 = vpow.pop %v245
      %v247 = vmul.f32 %v236, 1.442695
      %v248 = vpow.pop %v247
      %v249 = vadd.f32 %v238, 1.0
      %v250 = vadd.f32 %v240, 1.0
      %v251 = vadd.f32 %v242, 1.0
      %v252 = vadd.f32 %v244, 1.0
      %v253 = vadd.f32 %v246, 1.0
      %v254 = vadd.f32 %v248, 1.0
      %v255 = vrcp.pop %v249
      %v256 = vmul.f32 1.0, %v255
      %v257 = vrcp.pop %v250
      %v258 = vmul.f32 1.0, %v257
      %v259 = vrcp.pop %v251
      %v260 = vmul.f32 1.0, %v259
      %v261 = vrcp.pop %v252
      %v262 = vmul.f32 1.0, %v261
      %v263 = vrcp.pop %v253
      %v264 = vmul.f32 1.0, %v263
      %v265 = vrcp.pop %v254
      %v266 = vmul.f32 1.0, %v265
      %v267 = vmul.f32 %v225, 1.442695
      %v268 = vpow.pop %v267
      %v269 = vmul.f32 %v226, 1.442695
      %v270 = vpow.pop %v269
      %v271 = vmul.f32 %v227, 1.442695
      %v272 = vpow.pop %v271
      %v273 = vmul.f32 %v228, 1.442695
      %v274 = vpow.pop %v273
      %v275 = vmul.f32 %v229, 1.442695
      %v276 = vpow.pop %v275
      %v277 = vmul.f32 %v230, 1.442695
      %v278 = vpow.pop %v277
      %v279 = vld [vmem:[%s0] sm:$0xff]
      %v280 = vld [vmem:[%s0 + $0x8] sm:$0xff]
      %v281 = vld [vmem:[%s0 + $0x10] sm:$0xff]
      %v282 = vld [vmem:[%s1] sm:$0xff]
      %v283 = vld [vmem:[%s1 + $0x8] sm:$0xff]
      %v284 = vld [vmem:[%s1 + $0x10] sm:$0xff]
      %v285 = vld [vmem:[%s2] sm:$0xff]
      %v286 = vld [vmem:[%s2 + $0x8] sm:$0xff]
      %v287 = vld [vmem:[%s2 + $0x10] sm:$0xff]
      %v288 = vld [vmem:[%s3] sm:$0xff]
      %v289 = vld [vmem:[%s3 + $0x8] sm:$0xff]
      %291 = vset.pattern.permute.xlu0 0
      %292 = vperm.xlu0 %291, %v282
      %v293 = vpop.permute.xlu0 %292
      %296 = vset.pattern.permute.xlu0 0
      %297 = vperm.xlu0 %296, %v283
      %v298 = vpop.permute.xlu0 %297
      %301 = vset.pattern.permute.xlu0 0
      %302 = vperm.xlu0 %301, %v284
      %v303 = vpop.permute.xlu0 %302
      %vm305 = vcmp.ne.f32.partialorder %v293, 0.0
      %vm306 = vcmp.ne.f32.partialorder %v298, 0.0
      %vm307 = vcmp.ne.f32.partialorder %v303, 0.0
      %v308 = vmul.f32 %v268, %v293
      %v309 = vmul.f32 %v270, %v293
      %v310 = vmul.f32 %v272, %v298
      %v311 = vmul.f32 %v274, %v298
      %v312 = vmul.f32 %v276, %v303
      %v313 = vmul.f32 %v278, %v303
      %v314 = vsel %vm305, %v308, 0.0
      %v315 = vsel %vm305, %v309, 0.0
      %v316 = vsel %vm306, %v310, 0.0
      %v317 = vsel %vm306, %v311, 0.0
      %v318 = vsel %vm307, %v312, 0.0
      %v319 = vsel %vm307, %v313, 0.0
      %321 = vset.pattern.permute.xlu0 0
      %322 = vperm.xlu0 %321, %v279
      %v323 = vpop.permute.xlu0 %322
      %326 = vset.pattern.permute.xlu0 0
      %327 = vperm.xlu0 %326, %v280
      %v328 = vpop.permute.xlu0 %327
      %331 = vset.pattern.permute.xlu0 0
      %332 = vperm.xlu0 %331, %v281
      %v333 = vpop.permute.xlu0 %332
      %v335 = vmul.f32 %v256, %v323
      %v336 = vmul.f32 %v258, %v323
      %v337 = vmul.f32 %v260, %v328
      %v338 = vmul.f32 %v262, %v328
      %v339 = vmul.f32 %v264, %v333
      %v340 = vmul.f32 %v266, %v333
      %v341 = vadd.f32 %v335, %v314
      %v342 = vadd.f32 %v336, %v315
      %v343 = vadd.f32 %v337, %v316
      %v344 = vadd.f32 %v338, %v317
      %v345 = vadd.f32 %v339, %v318
      %v346 = vadd.f32 %v340, %v319
      %348 = vset.pattern.permute.xlu0 0
      %349 = vperm.xlu0 %348, %v285
      %v350 = vpop.permute.xlu0 %349
      %353 = vset.pattern.permute.xlu0 0
      %354 = vperm.xlu0 %353, %v286
      %v355 = vpop.permute.xlu0 %354
      %358 = vset.pattern.permute.xlu0 0
      %359 = vperm.xlu0 %358, %v287
      %v360 = vpop.permute.xlu0 %359
      %v362 = vmul.f32 %v225, %v350
      %v363 = vmul.f32 %v226, %v350
      %v364 = vmul.f32 %v227, %v355
      %v365 = vmul.f32 %v228, %v355
      %v366 = vmul.f32 %v229, %v360
      %v367 = vmul.f32 %v230, %v360
      %v368 = vadd.f32 %v341, %v362
      %v369 = vadd.f32 %v342, %v363
      %v370 = vadd.f32 %v343, %v364
      %v371 = vadd.f32 %v344, %v365
      %v372 = vadd.f32 %v345, %v366
      %v373 = vadd.f32 %v346, %v367
      %v374 = vadd.f32 %v368, %v288
      %v375 = vadd.f32 %v369, %v289
      %v376 = vadd.f32 %v370, %v288
      %v377 = vadd.f32 %v371, %v289
      %v378 = vadd.f32 %v372, %v288
      %v379 = vadd.f32 %v373, %v289
      %380 = vst [vmem:[%s224] sm:$0xff] %v374
      %381 = vst [vmem:[%s224 + $0x8] sm:$0xff] %v375
      %382 = vst [vmem:[%s224 + $0x20] sm:$0xff] %v376
      %383 = vst [vmem:[%s224 + $0x28] sm:$0xff] %v377
      %384 = vst [vmem:[%s224 + $0x40] sm:$0xff] %v378
      %385 = vst [vmem:[%s224 + $0x48] sm:$0xff] %v379
      %s386 = scalar_lea.vmem %s219, 16
      %v387 = vld [vmem:[%s386] ss:$8 sm:$0x3]
      %s388 = scalar_lea.vmem %s219, 48
      %v389 = vld [vmem:[%s388] ss:$8 sm:$0x3]
      %s390 = scalar_lea.vmem %s219, 80
      %v391 = vld [vmem:[%s390] ss:$8 sm:$0x3]
      %v392 = vlaneseq
      %vm393 = vcmp.ge.s32.totalorder %v392, 0
      %vm394 = vcmp.lt.s32.totalorder %v392, 256
      %vm395 = vmand %vm393, %vm394
      %s396 = scalar_lea.vmem %s224, 16
      %397 = vst.msk [vmem:[%s396] ss:$8 sm:$0x3] %vm395, %v387
      %398 = vst.msk [vmem:[%s396] ss:$8 sm:$0x0] %vm395, %v387
      %s399 = scalar_lea.vmem %s224, 48
      %400 = vst.msk [vmem:[%s399] ss:$8 sm:$0x3] %vm395, %v389
      %401 = vst.msk [vmem:[%s399] ss:$8 sm:$0x0] %vm395, %v389
      %s402 = scalar_lea.vmem %s224, 80
      %403 = vst.msk [vmem:[%s402] ss:$8 sm:$0x3] %vm395, %v391
      %404 = vst.msk [vmem:[%s402] ss:$8 sm:$0x0] %vm395, %v391
      %p405 = scmp.lt.s32.totalorder %s16, 1
      %s406 = scalar_select %p405, %s16, 1
      %s407 = smul.addr %s406, 12
      %s408 = smul.addr %s407, 8
      %s409 = scalar_lea.vmem %s5, %s408
      // Predicated region
      $region41: #{tpu_custom_call.1} parent=39 // pred_check
        %p410 = pneg %p144
      $region42: #{tpu_custom_call.1} parent=39 // pred_check_branch
        %412 = sbr.rel (%p410) target = $region44
      $region43: #{tpu_custom_call.1} parent=39 // pred_region
        _
      $region44: #{tpu_custom_call.1} parent=39 // pred_fallthru
        _
    $region40: #{tpu_custom_call.1} parent=5 // pred_fallthru
      _
    %p413 = scmp.le.s32.totalorder 2, %s11
    // Predicated region
    $region45: #{tpu_custom_call.1} parent=5 // pred_check
      %p414 = pneg %p413
    $region46: #{tpu_custom_call.1} parent=5 // pred_check_branch
      %416 = sbr.rel (%p414) target = $region48
    $region47: #{tpu_custom_call.1} parent=5 // pred_region
      %s417 = ssub.s32 %s11, 2
      // Predicated region
      $region49: #{tpu_custom_call.1} parent=47 // pred_check
        %p418 = pneg %p150
      $region50: #{tpu_custom_call.1} parent=47 // pred_check_branch
        %420 = sbr.rel (%p418) target = $region52
      $region51: #{tpu_custom_call.1} parent=47 // pred_region
        %p421 = scmp.lt.s32.totalorder %s17, 1
        %s422 = scalar_select %p421, %s17, 1
        %s423 = smul.addr %s422, 12
        %s424 = smul.addr %s423, 8
        %s425 = scalar_lea.vmem %s5, %s424
      $region52: #{tpu_custom_call.1} parent=47 // pred_fallthru
        _
    $region48: #{tpu_custom_call.1} parent=5 // pred_fallthru
      _
  $region6: #{tpu_custom_call.1} parent=0 // loop_footer
    %s15 = sadd.s32 1, %s11
  $region7: #{tpu_custom_call.1} parent=0 // loop_footer_branch
    %10 = sbr.rel target = $region3
  $region8: #{tpu_custom_call.1} parent=0 // loop_exit
    _

</llo_original>
